<compile_context>
chip_gen: v7x
topology: tpu7x:2x2x1
jax: 0.10.0
libtpu: 0.0.40
codegen_flags: <defaults>
</compile_context>

<pallas_src>
import jax
import jax.numpy as jnp
from jax.experimental import pallas as pl
from jax.experimental.pallas import tpu as pltpu


# ----------------------------- encoding decode ------------------------------
def DecodingToList(encoding):
    nodeEncoding = []
    index = 0
    k = 1
    while index < len(encoding) - 1:
        nodeEncoding.append(encoding[index:index + k])
        index += k
        k += 1
    nodeEncoding.append([encoding[-1]])
    return nodeEncoding


# ------------------------ pltpu.roll direction probe -------------------------
def _roll_matches_numpy():
    """Tiny one-off probe kernel: does pltpu.roll follow jnp.roll's direction?
    The im2col tap shifts below are correct under either convention; this
    compile-time constant selects the right sign."""
    def probe(x_ref, o_ref):
        o_ref[...] = pltpu.roll(x_ref[...], shift=1, axis=1)

    x = jnp.arange(8 * 512, dtype=jnp.float32).reshape(8, 512)
    y = pl.pallas_call(
        probe,
        out_shape=jax.ShapeDtypeStruct((8, 512), jnp.float32),
        in_specs=[pl.BlockSpec(memory_space=pltpu.MemorySpace.VMEM)],
        out_specs=pl.BlockSpec(memory_space=pltpu.MemorySpace.VMEM),
    )(x)
    return bool(jnp.array_equal(y, jnp.roll(x, 1, axis=1)))


# ------------------------------- fused kernel --------------------------------
def make_custom_block_kernel(encoding_list, N, H, W, C, roll_like_numpy):
    NHW = N * H * W
    n_block = len(encoding_list) + 1
    inv_nhw = 1.0 / NHW
    taps = [(kh - 1, kw - 1) for kh in range(3) for kw in range(3)]

    def kernel(x_ref, w_ref, gamma_ref, beta_ref, o_ref):
        # x_ref:     (C, NHW)          f32  channel-major lane-dense activation
        # w_ref:     (n_nodes, C, 9*C) bf16 packed conv weights (col = tap*C+cin)
        # gamma_ref: (n_nodes, C, 1)   f32  BN weight
        # beta_ref:  (n_nodes, C, 1)   f32  BN bias
        # o_ref:     (C, NHW)          f32  last node's output

        # Tap-validity masks, built once and shared by all 5 nodes.  The
        # circular lane roll wraps across row / image / batch borders; these
        # masks zero exactly the taps a padding=1 conv would read as zeros.
        lane = jax.lax.broadcasted_iota(jnp.int32, (1, NHW), 1)
        hh = (lane // W) % H
        ww = lane % W
        masks = [((hh + dh >= 0) & (hh + dh < H) &
                  (ww + dw >= 0) & (ww + dw < W)) for dh, dw in taps]

        def node(act, node_idx):
            """Conv3x3(pad=1) + BatchNorm2d(batch stats) + ReLU on a (C, NHW)
            activation.  Conv bias omitted: BN's mean subtraction cancels a
            per-channel bias exactly."""
            # im2col: 9 shifted+masked copies stacked on the sublane axis.
            # Lane rolls use the XLU slot, leaving VPU/MXU slots free; each
            # slab is cast to bf16 before the concat so the MXU operand is
            # assembled from half-width data.
            slabs = []
            for (dh, dw), valid in zip(taps, masks):
                s = dh * W + dw                       # flat-lane offset of tap
                if s == 0:
                    shifted = act
                else:
                    shift = (-s) % NHW if roll_like_numpy else s % NHW
                    shifted = pltpu.roll(act, shift=shift, axis=1)
                slabs.append(jnp.where(valid, shifted, 0.0)
                             .astype(jnp.bfloat16))
            patches = jnp.concatenate(slabs, axis=0)              # (9C, NHW) bf16

            # Single MXU matmul, K = 9*C, bf16 operands, f32 accumulation.
            conv = jnp.dot(w_ref[node_idx], patches,
                           preferred_element_type=jnp.float32)    # (C, NHW) f32

            # BatchNorm2d, training-mode batch stats over (N,H,W): one pass
            # (sum & sum-of-squares), biased variance, eps = 1e-5.  Fold the
            # normalization + affine into a single per-channel scale/bias so
            # the per-element epilogue is one multiply-add + ReLU.
            s1 = jnp.sum(conv, axis=1, keepdims=True)
            s2 = jnp.sum(conv * conv, axis=1, keepdims=True)
            mean = s1 * inv_nhw
            var = jnp.maximum(s2 * inv_nhw - mean * mean, 0.0)
            scale = gamma_ref[node_idx] * jax.lax.rsqrt(var + 1e-5)  # (C,1)
            bias = beta_ref[node_idx] - mean * scale                 # (C,1)
            return jnp.maximum(conv * scale + bias, 0.0)             # ReLU

        # ---------- static DAG wiring (mirror of CustomBlock.forward) --------
        outputs = [node(x_ref[...], 0)]            # init_node
        outputs.append(node(outputs[0], 1))        # block[0]
        for index in range(1, n_block):            # block[1:]
            node_inputs = [outputs[j]
                           for j, val in enumerate(encoding_list[index - 1])
                           if val == '1']
            if len(node_inputs) == 0:
                node_inputs.append(outputs[0])
            summed = node_inputs[0]
            for extra in node_inputs[1:]:          # skip-connection sums in VMEM
                summed = summed + extra
            outputs.append(node(summed, index + 1))
        o_ref[...] = outputs[-1]

    return kernel


def build_forward(encoding_list, N, H, W, in_channels, out_channels,
                  roll_like_numpy):
    C = max(in_channels, out_channels)   # uniform, sublane-aligned channel dim
    NHW = N * H * W
    kernel = make_custom_block_kernel(encoding_list, N, H, W, C,
                                      roll_like_numpy)

    def forward(x_nchw, w_all, gamma_all, beta_all):
        # NCHW -> channel-major lane-dense (C, N*H*W); zero-pad channels to C.
        # These boundary relayouts are a few KB; everything in between (all
        # 5 nodes + skip sums) is one fused pallas_call.
        x_cm = jnp.transpose(x_nchw, (1, 0, 2, 3)).reshape(in_channels, NHW)
        x_cm = jnp.pad(x_cm, ((0, C - in_channels), (0, 0)))
        y_cm = pl.pallas_call(
            kernel,
            out_shape=jax.ShapeDtypeStruct((C, NHW), jnp.float32),
            in_specs=[pl.BlockSpec(memory_space=pltpu.MemorySpace.VMEM)] * 4,
            out_specs=pl.BlockSpec(memory_space=pltpu.MemorySpace.VMEM),
        )(x_cm, w_all, gamma_all, beta_all)
        y = y_cm[:out_channels].reshape(out_channels, N, H, W)
        return jnp.transpose(y, (1, 0, 2, 3))      # back to NCHW

    return jax.jit(forward)


# --------------------------- parameter packing -------------------------------
def pack_params(w_list, gamma_list, beta_list, in_channels, out_channels):
    """Pack per-node (OHWI conv weight, BN gamma/beta) into the fused layout."""
    C = max(in_channels, out_channels)

    def pack_w(w_ohwi):                            # (Cout, 3, 3, Cin) f32
        cout, _, _, cin = w_ohwi.shape
        w = jnp.pad(w_ohwi, ((0, C - cout), (0, 0), (0, 0), (0, C - cin)))
        return w.reshape(C, 9 * C)                 # column = (kh*3+kw)*C + cin

    w_all = jnp.stack([pack_w(w) for w in w_list]).astype(jnp.bfloat16)
    gamma_all = jnp.stack(
        [jnp.pad(g, ((0, C - g.shape[0]), (0, 0)), constant_values=1.0)
         for g in gamma_list])
    beta_all = jnp.stack(
        [jnp.pad(b, ((0, C - b.shape[0]), (0, 0))) for b in beta_list])
    return w_all, gamma_all, beta_all


# --------------------------- pure-JAX f32 reference --------------------------
def custom_block_reference(x, encoding_list, w_list, gamma_list, beta_list):
    def node_ref(inp, w, gamma, beta):
        conv = jax.lax.conv_general_dilated(
            inp, w, window_strides=(1, 1), padding=((1, 1), (1, 1)),
            dimension_numbers=("NCHW", "OHWI", "NCHW"))
        mean = jnp.mean(conv, axis=(0, 2, 3), keepdims=True)
        var = jnp.mean(jnp.square(conv - mean), axis=(0, 2, 3), keepdims=True)
        y = (conv - mean) * jax.lax.rsqrt(var + 1e-5)
        y = y * gamma.reshape(1, -1, 1, 1) + beta.reshape(1, -1, 1, 1)
        return jnp.maximum(y, 0.0)

    n_block = len(encoding_list) + 1
    outputs = [node_ref(x, w_list[0], gamma_list[0], beta_list[0])]
    outputs.append(node_ref(outputs[0], w_list[1], gamma_list[1], beta_list[1]))
    for index in range(1, n_block):
        node_inputs = [outputs[j]
                       for j, val in enumerate(encoding_list[index - 1])
                       if val == '1']
        if len(node_inputs) == 0:
            node_inputs.append(outputs[0])
        summed = node_inputs[0]
        for extra in node_inputs[1:]:
            summed = summed + extra
        outputs.append(node_ref(summed, w_list[index + 1],
                                gamma_list[index + 1], beta_list[index + 1]))
    return outputs[-1]


# ----------------------------------- main ------------------------------------
if __name__ == "__main__":
    key = jax.random.PRNGKey(0)
    k_param, k_x = jax.random.split(key)

    encoding = "1011"                 # -> ['1', '01', ['1']]: 4 block nodes
    in_channels, out_channels = 4, 8
    N, H, W = 2, 16, 16

    encoding_list = DecodingToList(encoding)
    n_nodes = len(encoding_list) + 2  # init node + (len(encodingList)+1) nodes

    # Synthetic parameters (nn.Conv2d / nn.BatchNorm2d shapes).  Conv bias is
    # intentionally not generated: it cancels exactly under training-mode BN.
    node_in_c = [in_channels] + [out_channels] * (n_nodes - 1)
    keys = jax.random.split(k_param, n_nodes)
    w_list, gamma_list, beta_list = [], [], []
    for i in range(n_nodes):
        w_list.append(0.1 * jax.random.normal(
            keys[i], (out_channels, 3, 3, node_in_c[i]), jnp.float32))  # OHWI
        gamma_list.append(jnp.ones((out_channels, 1), jnp.float32))
        beta_list.append(jnp.zeros((out_channels, 1), jnp.float32))

    x = jax.random.normal(k_x, (N, in_channels, H, W), jnp.float32)     # NCHW

    w_all, gamma_all, beta_all = pack_params(
        w_list, gamma_list, beta_list, in_channels, out_channels)

    forward = build_forward(encoding_list, N, H, W, in_channels, out_channels,
                            roll_like_numpy=_roll_matches_numpy())
    y = forward(x, w_all, gamma_all, beta_all)
    jax.block_until_ready(y)

    # Compare against the pure-JAX f32 reference.  The kernel feeds the MXU
    # bf16 (f32 accumulation + f32 BN), so allow a loose absolute tolerance on
    # the O(1) post-BN activations.
    y_ref = custom_block_reference(x, encoding_list, w_list, gamma_list,
                                   beta_list)
    max_err = float(jnp.max(jnp.abs(y - y_ref)))

    assert y.shape == (N, out_channels, H, W)
    assert bool(jnp.all(jnp.isfinite(y)))
    assert max_err < 2e-1, f"max abs err vs reference = {max_err}"
    print("KERNEL_OK")
</pallas_src>

<mosaic_0001>
module attributes {stable_mosaic.version = 11 : i64} {
  func.func @probe(%arg0: memref<8x512xf32, #tpu.memory_space<vmem>>, %arg1: memref<8x512xf32, #tpu.memory_space<vmem>>) attributes {dimension_semantics = [], scalar_prefetch = 0 : i64, scratch_operands = 0 : i64, tpu.core_type = #tpu.core_type<tc>} {
    %c0 = arith.constant 0 : index
    %c0_0 = arith.constant 0 : index
    %0 = vector.load %arg0[%c0, %c0_0] : memref<8x512xf32, #tpu.memory_space<vmem>>, vector<8x512xf32>
    %c1_i32 = arith.constant 1 : i32
    %1 = tpu.dynamic_rotate %0 by %c1_i32 dim 1 : vector<8x512xf32>, i32 -> vector<8x512xf32>
    %c0_1 = arith.constant 0 : index
    %c0_2 = arith.constant 0 : index
    %2 = vector.load %arg1[%c0_1, %c0_2] : memref<8x512xf32, #tpu.memory_space<vmem>>, vector<8x512xf32>
    tpu.vector_store %arg1[%c0_1, %c0_2], %1 {strides = array<i32>} : memref<8x512xf32, #tpu.memory_space<vmem>>, vector<8x512xf32>,
    return
  }
}

</mosaic_0001>

<llo_original>
// kernel: tpu_custom_call.1
$region0: #{tpu_custom_call.1}
  #allocation0 [shape = 'u32[]', space=smem, size = 0x4, offset = 0x4, fixed_abs, tag = 'smem constant byte address 0x4 - core index']
  #allocation1 [shape = 'u32[144,128]{1,0:T(1,128)}', space=vmem, size = 0x12000, scoped, tag = 'internal scratch']
  %s0 = inlined_call_operand.hbm [shape: f32[8,512], index: 0, kind: input, shape index: {}]
  %s1 = inlined_call_operand.hbm [shape: f32[8,512], index: 1, kind: output, shape index: {}]
  %s2 = sld [smem:[#allocation0]]
  $region18: #{tpu_custom_call.1} parent=0
    _
  %s4 = ssub.s32 1, %s2
  %s5 = scalar_select 0, %s4, %s2
  $region1: #{tpu_custom_call.1} parent=0
    #allocation2 [shape = 'u8[16384]{0}', space=vmem, size = 0x4000, scoped, tag = 'input window, operand 0, single buffered']
    #allocation3 [shape = 's32[1]{0}', space=sflag, size = 0x4, scoped, tag = 'scoped memory for tpu_custom_call.1']
    #allocation4 [shape = 's32[1]{0}', space=sflag, size = 0x4, scoped, tag = 'scoped memory for tpu_custom_call.1']
    #allocation5 [shape = 'u8[16384]{0}', space=vmem, size = 0x4000, scoped, tag = 'output window, operand 0, single buffered']
    %6 = vsyncpa [#allocation3], 0
    %7 = vsyncpa [#allocation4], 0
    // Predicated region
    $region2: #{tpu_custom_call.1} parent=1 // pred_check
      _
    $region3: #{tpu_custom_call.1} parent=1 // pred_check_branch
      %9 = sbr.rel (0) target = $region5
    $region4: #{tpu_custom_call.1} parent=1 // pred_region
      %s11 = ssub.s32 512, 512
      %12 = vsyncadd [#allocation3], %s11
      %s14 = sshll.u32 [#allocation2], 4
      %s15 = int_to_ptr.vmem [resolvable:$true] %s14
      %17 = dma.hbm_to_vmem [thread:$0]  %s0, 512, %s15, [#allocation3]
    $region5: #{tpu_custom_call.1} parent=1 // pred_fallthru
      _
    // Predicated region
    $region6: #{tpu_custom_call.1} parent=1 // pred_check
      _
    $region7: #{tpu_custom_call.1} parent=1 // pred_check_branch
      %19 = sbr.rel (0) target = $region9
    $region8: #{tpu_custom_call.1} parent=1 // pred_region
      %20 = dma.done [#allocation3], 512
    $region9: #{tpu_custom_call.1} parent=1 // pred_fallthru
      _
    %v21 = vld [vmem:[#allocation2] sm:$0xff]
    %v22 = vld [vmem:[#allocation2 + $0x8] sm:$0xff]
    %v23 = vld [vmem:[#allocation2 + $0x10] sm:$0xff]
    %v24 = vld [vmem:[#allocation2 + $0x18] sm:$0xff]
    %25 = vrot.lane.b32.xlu0 %v21, 1
    %v26 = vpop.permute.xlu0 %25
    %27 = vrot.lane.b32.xlu0 %v22, 1
    %v28 = vpop.permute.xlu0 %27
    %29 = vrot.lane.b32.xlu0 %v23, 1
    %v30 = vpop.permute.xlu0 %29
    %31 = vrot.lane.b32.xlu0 %v24, 1
    %v32 = vpop.permute.xlu0 %31
    %v33 = vlaneseq
    %v34 = vand.u32 %v33, 127
    %vm35 = vcmp.lt.s32.totalorder %v34, 1
    %v36 = vsel %vm35, %v30, %v32
    %v37 = vsel %vm35, %v28, %v30
    %v38 = vsel %vm35, %v26, %v28
    %v39 = vsel %vm35, %v32, %v26
    %40 = vst [vmem:[#allocation5] sm:$0xff] %v39
    %41 = vst [vmem:[#allocation5 + $0x8] sm:$0xff] %v38
    %42 = vst [vmem:[#allocation5 + $0x10] sm:$0xff] %v37
    %43 = vst [vmem:[#allocation5 + $0x18] sm:$0xff] %v36
    // Predicated region
    $region10: #{tpu_custom_call.1} parent=1 // pred_check
      _
    $region11: #{tpu_custom_call.1} parent=1 // pred_check_branch
      %45 = sbr.rel (0) target = $region13
    $region12: #{tpu_custom_call.1} parent=1 // pred_region
      %s47 = ssub.s32 512, 512
      %48 = vsyncadd [#allocation4], %s47
      %s50 = sshll.u32 [#allocation5], 4
      %s51 = int_to_ptr.vmem [resolvable:$true] %s50
      %53 = dma.vmem_to_hbm [thread:$0]  %s51, 512, %s1, [#allocation4]
    $region13: #{tpu_custom_call.1} parent=1 // pred_fallthru
      _
    // Predicated region
    $region14: #{tpu_custom_call.1} parent=1 // pred_check
      _
    $region15: #{tpu_custom_call.1} parent=1 // pred_check_branch
      %55 = sbr.rel (0) target = $region17
    $region16: #{tpu_custom_call.1} parent=1 // pred_region
      %56 = dma.done [#allocation4], 512
    $region17: #{tpu_custom_call.1} parent=1 // pred_fallthru
      _
    %57 = vsyncpa [#allocation3], 1
    %58 = vsyncpa [#allocation4], 1

</llo_original>
